<compile_context>
chip_gen: v5e
topology: v5e:2x2
jax: 0.10.0
libtpu: 0.0.40
codegen_flags: <defaults>
</compile_context>

<pallas_src>
import functools

import jax
import jax.numpy as jnp
from jax.experimental import pallas as pl
from jax.experimental.pallas import tpu as pltpu


def _round_up(x, m):
    return (x + m - 1) // m * m


def _sublane_multiple(itemsize):
    # f32 -> 8, bf16 -> 16, int8/fp8 -> 32 (packed sublane tiling requirement)
    return 8 * max(1, 4 // int(itemsize))


def _vmem_capacity_bytes():
    try:
        return int(pltpu.get_tpu_info().vmem_capacity_bytes)
    except Exception:
        return 64 * 1024 * 1024  # conservative (v7x per-TensorCore)


def _vmem_budget():
    """(in-kernel footprint budget, vmem_limit_bytes), generation-aware."""
    cap = _vmem_capacity_bytes()
    if cap >= 128 * 1024 * 1024:          # v5e / v6e: 128 MiB physical VMEM
        return 40 * 1024 * 1024, 80 * 1024 * 1024
    # v7x (64 MiB physical per TC) or unknown: stay conservative, leave headroom
    return 20 * 1024 * 1024, 48 * 1024 * 1024


def _choose_tile_n(n, c, itemsize, footprint_budget):
    """Rows per tile: as big as fits the footprint budget (no fixed row cap)."""
    sub = _sublane_multiple(itemsize)
    if n <= sub:
        return n  # single block equal to the full array dim (always legal)
    # footprint/row ~= 2 pipeline buffers (native dtype) + ~3 f32 temporaries
    per_row = max(1, c) * (2 * int(itemsize) + 3 * 4)
    rows = (footprint_budget // per_row) // sub * sub
    rows = max(sub, rows)
    return min(rows, (n // sub) * sub)


def _ce_nll_kernel(logits_ref, labels_ref, nll_ref, *, n_valid):
    t = pl.program_id(1)
    logits = logits_ref[0].astype(jnp.float32)   # [tile_n, C] (cast in-kernel)
    labels = labels_ref[0]                       # [tile_n, 1] int32, 1-based
    tn, c = logits.shape

    # numerically-stable log-sum-exp; no log_softmax / one-hot materialization
    m = jnp.max(logits, axis=-1, keepdims=True)                    # [tn, 1]
    shifted = logits - m                                           # [tn, C]
    sum_exp = jnp.sum(jnp.exp(shifted), axis=-1, keepdims=True)    # [tn, 1]

    tgt = labels - 1                                               # 0-based
    col = jax.lax.broadcasted_iota(jnp.int32, (tn, c), dimension=1)
    tgt_shifted = jnp.sum(jnp.where(col == tgt, shifted, 0.0),
                          axis=-1, keepdims=True)                  # [tn, 1]

    nll = jnp.log(sum_exp) - tgt_shifted                           # [tn, 1]

    # tail masking keyed off the GLOBAL row index (tail-block reads are
    # unspecified); also guard out-of-range labels.
    row = t * tn + jax.lax.broadcasted_iota(jnp.int32, (tn, 1), dimension=0)
    valid = row < n_valid
    valid = jnp.logical_and(valid, jnp.logical_and(labels >= 1, labels <= c))
    nll_ref[0] = jnp.where(valid, nll, 0.0)


@functools.partial(jax.jit, static_argnums=(2,))
def _ce_nll_sum(logits, labels, tile_override=None):
    """Sum over all samples of -log softmax(logits)[label-1].

    logits: [P, N, C] (any float dtype), labels: [P, N] (1-based ints).
    """
    p_dim, n, c = logits.shape
    itemsize = jnp.dtype(logits.dtype).itemsize
    footprint_budget, vmem_limit = _vmem_budget()
    tile_n = tile_override or _choose_tile_n(n, c, itemsize, footprint_budget)
    n_tiles = pl.cdiv(n, tile_n)
    labels3 = labels.astype(jnp.int32).reshape(p_dim, n, 1)

    bytes_accessed = (logits.size * int(itemsize)          # logits read
                      + labels3.size * 4                   # labels read
                      + p_dim * n * 4)                     # per-sample NLL write
    cost = pl.CostEstimate(flops=6 * p_dim * n * c,
                           transcendentals=p_dim * n * c,
                           bytes_accessed=int(bytes_accessed))

    nll = pl.pallas_call(
        functools.partial(_ce_nll_kernel, n_valid=n),
        out_shape=jax.ShapeDtypeStruct((p_dim, n, 1), jnp.float32),
        grid=(p_dim, n_tiles),
        in_specs=[
            pl.BlockSpec((1, tile_n, c), lambda p, t: (p, t, 0)),
            pl.BlockSpec((1, tile_n, 1), lambda p, t: (p, t, 0)),
        ],
        out_specs=pl.BlockSpec((1, tile_n, 1), lambda p, t: (p, t, 0)),
        compiler_params=pltpu.CompilerParams(
            dimension_semantics=("parallel", "parallel"),
            vmem_limit_bytes=vmem_limit),
        cost_estimate=cost,
    )(logits, labels3)
    return jnp.sum(nll, dtype=jnp.float32)


def _ce_mean_single(logits, labels_1based):
    logits = jnp.asarray(logits)
    labels = jnp.asarray(labels_1based)
    n = logits.shape[0]
    return _ce_nll_sum(logits[None], labels[None]) / n


# Only stack equal-shape list entries when they're tiny; otherwise the stack is
# a full extra HBM copy in front of a bandwidth-bound kernel.
_STACK_BYTES_THRESHOLD = 4 * 1024 * 1024


def classification_loss(cls_res, labels_list):
    """Mirrors ClassificationLoss.forward: list of (logits, labels) pairs
    (average of per-pair mean CE) or a single pair (mean CE)."""
    if isinstance(cls_res, (list, tuple)):
        logits_list = [jnp.asarray(x) for x in cls_res]
        labels_arrs = [jnp.asarray(x) for x in labels_list]
        shapes = {x.shape for x in logits_list}
        dtypes = {x.dtype for x in logits_list}
        total_bytes = sum(x.size * x.dtype.itemsize for x in logits_list)
        if len(shapes) == 1 and len(dtypes) == 1 and total_bytes <= _STACK_BYTES_THRESHOLD:
            # small equal-shape pairs: fuse into one pallas_call over a leading
            # pair axis; equal N per pair => mean of per-pair means == global mean
            logits = jnp.stack(logits_list)
            labels = jnp.stack(labels_arrs)
            p_dim, n = logits.shape[0], logits.shape[1]
            return _ce_nll_sum(logits, labels) / (p_dim * n)
        # large or ragged pairs: one kernel per pair, average the scalar means
        total = jnp.float32(0.0)
        for lg, lb in zip(logits_list, labels_arrs):
            total = total + _ce_mean_single(lg, lb)
        return total / len(logits_list)
    return _ce_mean_single(cls_res, labels_list)


if __name__ == "__main__":
    key = jax.random.PRNGKey(0)
    ks = jax.random.split(key, 8)

    def ref_ce(lg, lb):
        ls = jax.nn.log_softmax(jnp.asarray(lg, jnp.float32), axis=-1)
        return -jnp.mean(ls[jnp.arange(lg.shape[0]), lb - 1])

    # 1) single-tensor branch (small batch, 32 classes)
    N, C = 8, 32
    logits = jax.random.normal(ks[0], (N, C), dtype=jnp.float32)
    labels = jax.random.randint(ks[1], (N,), 1, C + 1, dtype=jnp.int32)  # 1-based
    loss_single = classification_loss(logits, labels)
    assert jnp.allclose(loss_single, ref_ce(logits, labels), atol=1e-5), (
        loss_single, ref_ce(logits, labels))

    # 2) equal-shape list branch (tiny -> fused into one pallas_call, P=2)
    logits2 = jax.random.normal(ks[2], (N, C), dtype=jnp.float32)
    labels2 = jax.random.randint(ks[3], (N,), 1, C + 1, dtype=jnp.int32)
    loss_list = classification_loss([logits, logits2], [labels, labels2])
    ref_list = (ref_ce(logits, labels) + ref_ce(logits2, labels2)) / 2.0
    assert jnp.allclose(loss_list, ref_list, atol=1e-5), (loss_list, ref_list)

    # 3) ragged list branch (per-pair path; second pair exercises a partial tail tile)
    N3 = 12
    logits3 = jax.random.normal(ks[4], (N3, C), dtype=jnp.float32)
    labels3 = jax.random.randint(ks[5], (N3,), 1, C + 1, dtype=jnp.int32)
    loss_ragged = classification_loss([logits, logits3], [labels, labels3])
    ref_ragged = (ref_ce(logits, labels) + ref_ce(logits3, labels3)) / 2.0
    assert jnp.allclose(loss_ragged, ref_ragged, atol=1e-5), (loss_ragged, ref_ragged)

    # 4) multi-tile grid with a non-divisible tail (forced small tile) and C != k*128
    N4, C4 = 200, 257
    logits4 = jax.random.normal(ks[6], (N4, C4), dtype=jnp.float32)
    labels4 = jax.random.randint(ks[7], (N4,), 1, C4 + 1, dtype=jnp.int32)
    loss_tail = _ce_nll_sum(logits4[None], labels4[None], 64) / N4
    assert jnp.allclose(loss_tail, ref_ce(logits4, labels4), atol=1e-4), (
        loss_tail, ref_ce(logits4, labels4))

    # 5) bf16 logits (cast happens in-kernel; no wrapper pre-cast)
    N5, C5 = 32, 128
    logits5 = jax.random.normal(ks[0], (N5, C5), dtype=jnp.bfloat16)
    labels5 = jax.random.randint(ks[1], (N5,), 1, C5 + 1, dtype=jnp.int32)
    loss_bf16 = classification_loss(logits5, labels5)
    assert jnp.allclose(loss_bf16, ref_ce(logits5, labels5), atol=1e-4), (
        loss_bf16, ref_ce(logits5, labels5))

    jax.block_until_ready(loss_single)
    jax.block_until_ready(loss_list)
    jax.block_until_ready(loss_ragged)
    jax.block_until_ready(loss_tail)
    jax.block_until_ready(loss_bf16)
    print("KERNEL_OK")
</pallas_src>

<mosaic_0001>
module attributes {stable_mosaic.version = 11 : i64} {
  func.func @_ce_nll_kernel(%arg0: i32, %arg1: i32, %arg2: memref<1x8x32xf32, #tpu.memory_space<vmem>>, %arg3: memref<1x8x1xi32, #tpu.memory_space<vmem>>, %arg4: memref<1x8x1xf32, #tpu.memory_space<vmem>>) attributes {dimension_semantics = [#tpu.dimension_semantics<parallel>, #tpu.dimension_semantics<parallel>], iteration_bounds = array<i64: 1, 1>, scalar_prefetch = 0 : i64, scratch_operands = 0 : i64, tpu.core_type = #tpu.core_type<tc>, window_params = [{transform_indices = @transform_0, window_bounds = array<i64: 1, 8, 32>}, {transform_indices = @transform_1, window_bounds = array<i64: 1, 8, 1>}, {transform_indices = @transform_2, window_bounds = array<i64: 1, 8, 1>}]} {
    %c0 = arith.constant 0 : index
    %c0_0 = arith.constant 0 : index
    %c0_1 = arith.constant 0 : index
    %0 = vector.load %arg2[%c0, %c0_0, %c0_1] : memref<1x8x32xf32, #tpu.memory_space<vmem>>, vector<1x8x32xf32>
    %1 = vector.shape_cast %0 : vector<1x8x32xf32> to vector<8x32xf32>
    %c0_2 = arith.constant 0 : index
    %c0_3 = arith.constant 0 : index
    %c0_4 = arith.constant 0 : index
    %2 = vector.load %arg3[%c0_2, %c0_3, %c0_4] : memref<1x8x1xi32, #tpu.memory_space<vmem>>, vector<1x8x1xi32>
    %3 = vector.shape_cast %2 : vector<1x8x1xi32> to vector<8x1xi32>
    %cst = arith.constant dense<0xFF800000> : vector<8xf32>
    %4 = vector.multi_reduction <maximumf>, %1, %cst [1] : vector<8x32xf32> to vector<8xf32>
    %5 = vector.shape_cast %4 : vector<8xf32> to vector<8x1xf32>
    %6 = vector.broadcast %5 : vector<8x1xf32> to vector<8x32xf32>
    %7 = arith.subf %1, %6 : vector<8x32xf32>
    %8 = math.exp %7 : vector<8x32xf32>
    %cst_5 = arith.constant dense<0.000000e+00> : vector<8xf32>
    %9 = vector.multi_reduction <add>, %8, %cst_5 [1] : vector<8x32xf32> to vector<8xf32>
    %10 = vector.shape_cast %9 : vector<8xf32> to vector<8x1xf32>
    %c1_i32 = arith.constant 1 : i32
    %11 = vector.broadcast %c1_i32 : i32 to vector<8x1xi32>
    %12 = arith.subi %3, %11 : vector<8x1xi32>
    %13 = tpu.iota {dimensions = array<i32: 1>} : vector<8x32xi32>
    %14 = vector.broadcast %12 : vector<8x1xi32> to vector<8x32xi32>
    %15 = arith.cmpi eq, %13, %14 : vector<8x32xi32>
    %cst_6 = arith.constant 0.000000e+00 : f32
    %16 = vector.broadcast %cst_6 : f32 to vector<8x32xf32>
    %17 = arith.select %15, %7, %16 : vector<8x32xi1>, vector<8x32xf32>
    %cst_7 = arith.constant dense<0.000000e+00> : vector<8xf32>
    %18 = vector.multi_reduction <add>, %17, %cst_7 [1] : vector<8x32xf32> to vector<8xf32>
    %19 = vector.shape_cast %18 : vector<8xf32> to vector<8x1xf32>
    %20 = math.log %10 : vector<8x1xf32>
    %21 = arith.subf %20, %19 : vector<8x1xf32>
    %c8_i32 = arith.constant 8 : i32
    %22 = arith.muli %arg1, %c8_i32 : i32
    %23 = tpu.iota {dimensions = array<i32: 0>} : vector<8x1xi32>
    %24 = vector.broadcast %22 : i32 to vector<8x1xi32>
    %25 = arith.addi %24, %23 : vector<8x1xi32>
    %c8_i32_8 = arith.constant 8 : i32
    %26 = vector.broadcast %c8_i32_8 : i32 to vector<8x1xi32>
    %27 = arith.cmpi slt, %25, %26 : vector<8x1xi32>
    %c1_i32_9 = arith.constant 1 : i32
    %28 = vector.broadcast %c1_i32_9 : i32 to vector<8x1xi32>
    %29 = arith.cmpi sge, %3, %28 : vector<8x1xi32>
    %c32_i32 = arith.constant 32 : i32
    %30 = vector.broadcast %c32_i32 : i32 to vector<8x1xi32>
    %31 = arith.cmpi sle, %3, %30 : vector<8x1xi32>
    %32 = arith.andi %29, %31 : vector<8x1xi1>
    %33 = arith.andi %27, %32 : vector<8x1xi1>
    %cst_10 = arith.constant 0.000000e+00 : f32
    %34 = vector.broadcast %cst_10 : f32 to vector<8x1xf32>
    %35 = arith.select %33, %21, %34 : vector<8x1xi1>, vector<8x1xf32>
    %c0_11 = arith.constant 0 : index
    %c0_12 = arith.constant 0 : index
    %c0_13 = arith.constant 0 : index
    %36 = vector.load %arg4[%c0_11, %c0_12, %c0_13] : memref<1x8x1xf32, #tpu.memory_space<vmem>>, vector<1x8x1xf32>
    %37 = vector.shape_cast %36 : vector<1x8x1xf32> to vector<8x1xf32>
    %38 = vector.shape_cast %35 : vector<8x1xf32> to vector<1x8x1xf32>
    tpu.vector_store %arg4[%c0_11, %c0_12, %c0_13], %38 {strides = array<i32>} : memref<1x8x1xf32, #tpu.memory_space<vmem>>, vector<1x8x1xf32>,
    return
  }
  func.func @transform_0(%arg0: i32, %arg1: i32) -> (i32, i32, i32) {
    %c0_i32 = arith.constant 0 : i32
    %c0_i32_0 = arith.constant 0 : i32
    return %arg0, %arg1, %c0_i32 : i32, i32, i32
  }
  func.func @transform_1(%arg0: i32, %arg1: i32) -> (i32, i32, i32) {
    %c0_i32 = arith.constant 0 : i32
    %c0_i32_0 = arith.constant 0 : i32
    return %arg0, %arg1, %c0_i32 : i32, i32, i32
  }
  func.func @transform_2(%arg0: i32, %arg1: i32) -> (i32, i32, i32) {
    %c0_i32 = arith.constant 0 : i32
    %c0_i32_0 = arith.constant 0 : i32
    return %arg0, %arg1, %c0_i32 : i32, i32, i32
  }
}

</mosaic_0001>

<llo_original>
// kernel: _ce_nll_sum.1
$region0: #{_ce_nll_sum.1}
  #allocation0 [shape = 'u32[]', space=smem, size = 0x4, offset = 0x4, fixed_abs, tag = 'smem constant byte address 0x4 - core index']
  #allocation1 [shape = 'u32[72,128]{1,0:T(1,128)}', space=vmem, size = 0x9000, scoped, tag = 'internal scratch']
  %s0 = inlined_call_operand.vmem [shape: f32[1,8,32], index: 0, kind: input, shape index: {}]
  %s1 = inlined_call_operand.vmem [shape: s32[1,8,1], index: 1, kind: input, shape index: {}]
  %s2 = inlined_call_operand.vmem [shape: f32[1,8,1], index: 2, kind: output, shape index: {}]
  %s3 = sld [smem:[#allocation0]]
  $region18: #{_ce_nll_sum.1} parent=0
    _
  %s5 = ssub.s32 1, %s3
  %s6 = scalar_select 0, %s5, %s3
  // Predicated region
  $region2: #{_ce_nll_sum.1} parent=0 // pred_check
    _
  $region3: #{_ce_nll_sum.1} parent=0 // pred_check_branch
    %8 = sbr.rel (0) target = $region5
  $region4: #{_ce_nll_sum.1} parent=0 // pred_region
    _
  $region5: #{_ce_nll_sum.1} parent=0 // pred_fallthru
    _
  // Predicated region
  $region6: #{_ce_nll_sum.1} parent=0 // pred_check
    _
  $region7: #{_ce_nll_sum.1} parent=0 // pred_check_branch
    %10 = sbr.rel (0) target = $region9
  $region8: #{_ce_nll_sum.1} parent=0 // pred_region
    _
  $region9: #{_ce_nll_sum.1} parent=0 // pred_fallthru
    _
  %v11 = vld [vmem:[%s0] sm:$0xff]
  %v12 = vld [vmem:[%s1] sm:$0xff]
  %vm13 = vcmask 261120
  %v14 = vsel %vm13, %v11, -inf
  %15 = vmax.xlane.f32.xlu0 %v14
  %v16 = vpop.xlane.xlu0 %15
  %v17 = vsub.f32 %v11, %v16
  %v18 = vmul.f32 %v17, 1.442695
  %v19 = vpow.pop %v18
  %v20 = vsel %vm13, %v19, 0.0
  %21 = vadd.xlane.f32.xlu0 %v20
  %v22 = vpop.xlane.xlu0 %21
  %v23 = vsub.s32 %v12, 1
  %v24 = vlaneseq
  %v25 = vand.u32 %v24, 127
  %26 = vset.pattern.permute.xlu0 0
  %27 = vperm.xlu0 %26, %v23
  %v28 = vpop.permute.xlu0 %27
  %vm29 = vcmp.eq.s32.totalorder %v25, %v28
  %v30 = vsel %vm29, %v17, 0.0
  %v31 = vsel %vm13, %v30, 0.0
  %32 = vadd.xlane.f32.xlu0 %v31
  %v33 = vpop.xlane.xlu0 %32
  %v34 = vlog2.pop %v22
  %v35 = vmul.f32 %v34, 0.6931472
  %v36 = vsub.f32 %v35, %v33
  %s37 = smul.u32 0, 8
  %v38 = vlaneseq
  %v39 = vshrl.u32 %v38, 7
  %v40 = vstv %s37
  %v41 = vadd.s32 %v40, %v39
  %vm42 = vcmp.lt.s32.totalorder %v41, 8
  %vm43 = vcmp.ge.s32.totalorder %v12, 1
  %vm44 = vcmp.le.s32.totalorder %v12, 32
  %vm45 = vmand %vm43, %vm44
  %vm46 = vmand %vm42, %vm45
  %v47 = vsel %vm46, %v36, 0.0
  %vm48 = vcmask 7168
  %49 = vst.msk [vmem:[%s2] sm:$0xff] %vm48, %v47
  // Predicated region
  $region10: #{_ce_nll_sum.1} parent=0 // pred_check
    _
  $region11: #{_ce_nll_sum.1} parent=0 // pred_check_branch
    %51 = sbr.rel (0) target = $region13
  $region12: #{_ce_nll_sum.1} parent=0 // pred_region
    _
  $region13: #{_ce_nll_sum.1} parent=0 // pred_fallthru
    _
  // Predicated region
  $region14: #{_ce_nll_sum.1} parent=0 // pred_check
    _
  $region15: #{_ce_nll_sum.1} parent=0 // pred_check_branch
    %53 = sbr.rel (0) target = $region17
  $region16: #{_ce_nll_sum.1} parent=0 // pred_region
    _
  $region17: #{_ce_nll_sum.1} parent=0 // pred_fallthru
    _

</llo_original>
